<compile_context>
chip_gen: v7x
topology: tpu7x:2x2x1
jax: 0.10.0
libtpu: 0.0.40
codegen_flags: <defaults>
</compile_context>

<pallas_src>
import functools

import jax
import jax.numpy as jnp
from jax.experimental import pallas as pl
from jax.experimental.pallas import tpu as pltpu

# ---- Vehicle model constants (stand-in for Dynamic(**RCParams('pwm'))) ----
LF = 0.16      # model.lf
LR = 0.15      # model.lr
MASS = 3.794   # model.mass
IZ = 0.1       # model.Iz
DT = 0.05      # TODO(synk): args.dt comes from argparse in the reference script.

# ---- ResidualModel parameters (deterministic init from __init__) ----
FY_W = 10.0    # self.Fy.weight.data.fill_(10.0)
RY_W = 10.0    # self.Ry.weight.data.fill_(10.0)
# self.Rx is overwritten with Frx = 0.0 in forward() -> unused.

N_DIVS = 2     # default n_divs in forward()

# Compile-time folded constants (no SMEM traffic).
SCALE = DT / N_DIVS            # deltat / n_divs
C_WF = MASS * LF / IZ          # coefficient on (Ffy*cos(theta)) in w_dot
C_WR = MASS * LR / IZ          # coefficient on Fry in w_dot

LANES = 128
MIN_GRID_STEPS = 4             # enough steps for v7x megacore + pipelining
DEFAULT_TILE_ROWS = 1024       # 7 planes * 1024 * 128 * 4B * 2 bufs ~= 7.3 MiB


def _round_up(v, m):
    return ((v + m - 1) // m) * m


def _residual_kernel(x_ref, out_ref, *, fast_atan):
    # x_ref:   (4, TR, 128) block -> rows: theta, vx, vy, w  (dense slabs)
    # out_ref: (3, TR, 128) block -> rows: d_vx, d_vy, d_w
    theta = x_ref[0]
    vx0 = x_ref[1]
    vy0 = x_ref[2]
    w0 = x_ref[3]

    # sin/cos of theta are loop-invariant -> computed once (EUP).
    sin_t = jnp.sin(theta)
    cos_t = jnp.cos(theta)

    out_vx = jnp.zeros_like(vx0)
    out_vy = jnp.zeros_like(vx0)
    out_w = jnp.zeros_like(vx0)

    # n_divs is small and static -> unrolled Python loop (traced N_DIVS times).
    for _ in range(N_DIVS):
        vx = vx0 + out_vx
        vy = vy0 + out_vy
        w = w0 + out_w

        yf = w * LF + vy
        yr = w * LR - vy
        if fast_atan:
            # vx > 0 fast path: approx reciprocal goes to the EUP slot (free
            # relative to the binding VALU slot) and arctan drops atan2's
            # quadrant-select logic.
            inv_vx = pl.reciprocal(vx, approx=True)
            alpha_f = theta - jnp.arctan(yf * inv_vx)
            alpha_r = jnp.arctan(yr * inv_vx)
        else:
            # Exact torch.atan2 quadrant behaviour for any sign of vx.
            alpha_f = theta - jnp.arctan2(yf, vx)
            alpha_r = jnp.arctan2(yr, vx)

        ffy = FY_W * alpha_f        # self.Fy(alpha_f), Linear(1,1,bias=False)
        fry = RY_W * alpha_r        # self.Ry(alpha_r), Linear(1,1,bias=False)
        ffy_cos = ffy * cos_t       # hoisted: reused by vy_dot and w_dot

        # Frx is overwritten with 0.0 in the reference; pitch == 0 drops the
        # -9.8*sin(pitch) term.  a_pred in the reference is dead code.
        vx_dot = vy * w - ffy * sin_t
        vy_dot = fry + ffy_cos - vx * w
        w_dot = ffy_cos * C_WF - fry * C_WR   # == mass*(Ffy*lf*cos - Fry*lr)/Iz

        out_vx = out_vx + vx_dot * SCALE
        out_vy = out_vy + vy_dot * SCALE
        out_w = out_w + w_dot * SCALE

    odt = out_ref.dtype
    out_ref[0, :, :] = out_vx.astype(odt)
    out_ref[1, :, :] = out_vy.astype(odt)
    out_ref[2, :, :] = out_w.astype(odt)


def choose_tiling(n, tile_rows=DEFAULT_TILE_ROWS):
    """Pick (block_rows, padded_rows) for a batch of n elements."""
    r = pl.cdiv(n, LANES)
    # At least enough steps to fill tile_rows, at least MIN_GRID_STEPS when the
    # batch allows 8-row tiles, and never fewer than 1 step.
    steps = max(pl.cdiv(r, tile_rows), min(MIN_GRID_STEPS, pl.cdiv(r, 8)), 1)
    # Near-equal tiles -> padding is at most 7 rows (vs up to a whole tile).
    tr = _round_up(pl.cdiv(r, steps), 8)
    r_pad = _round_up(r, tr)
    return tr, r_pad


def pack_inputs(x, tile_rows=DEFAULT_TILE_ROWS):
    """[N, D>=6] -> ([4, R_pad, 128] f32, block_rows).

    Hoist this out of a fitting loop: the slice/transpose/pad repack is an
    extra HBM pass comparable to the kernel's own traffic.
    """
    n = x.shape[0]
    tr, r_pad = choose_tiling(n, tile_rows)
    n_pad = r_pad * LANES
    # Only the 4 used columns: theta, vx, vy, w  (pwm / steer never read).
    cols = jnp.asarray(x[:, 2:6], jnp.float32).T              # (4, N)
    cols = jnp.pad(cols, ((0, 0), (0, n_pad - n)))             # atan2(0,0)=0 on pad
    return cols.reshape(4, r_pad, LANES), tr


def residual_forward_packed(x_packed, block_rows, *, fast_atan=False,
                            out_dtype=jnp.float32):
    """x_packed: [4, R_pad, 128] -> [3, R_pad, 128] residual increments."""
    _, r_pad, lanes = x_packed.shape
    assert lanes == LANES and r_pad % block_rows == 0
    n_pad = r_pad * LANES

    cost = pl.CostEstimate(
        flops=int(90 * N_DIVS * n_pad),
        transcendentals=int((2 + 2 * N_DIVS) * n_pad),
        bytes_accessed=int((4 + 3) * 4 * n_pad),
    )

    # in(4) + out(3) planes, double-buffered, f32.
    vmem_need = 2 * (4 + 3) * block_rows * LANES * 4
    compiler_kwargs = dict(dimension_semantics=("parallel",))
    if vmem_need > (12 << 20):
        # Tiles past ~1024 rows outgrow v5e's 16 MiB scoped-VMEM default.
        compiler_kwargs["vmem_limit_bytes"] = int(vmem_need + (8 << 20))

    kernel = functools.partial(_residual_kernel, fast_atan=fast_atan)
    return pl.pallas_call(
        kernel,
        out_shape=jax.ShapeDtypeStruct((3, r_pad, LANES), out_dtype),
        grid=(r_pad // block_rows,),
        in_specs=[pl.BlockSpec((4, block_rows, LANES), lambda i: (0, i, 0))],
        out_specs=pl.BlockSpec((3, block_rows, LANES), lambda i: (0, i, 0)),
        compiler_params=pltpu.CompilerParams(**compiler_kwargs),
        cost_estimate=cost,
    )(x_packed)


def unpack_outputs(out_packed, n):
    """[3, R_pad, 128] -> [N, 3] (PyTorch layout)."""
    r_pad = out_packed.shape[1]
    return out_packed.reshape(3, r_pad * LANES)[:, :n].T


@functools.partial(jax.jit, static_argnames=("tile_rows", "fast_atan"))
def residual_forward(x, tile_rows=DEFAULT_TILE_ROWS, fast_atan=False):
    """x: [N, D>=6] -> [N, 3] float32 residual increments (PyTorch layout)."""
    n = x.shape[0]
    x_packed, block_rows = pack_inputs(x, tile_rows)
    out_packed = residual_forward_packed(x_packed, block_rows,
                                         fast_atan=fast_atan)
    return unpack_outputs(out_packed, n)


def residual_forward_ref(x, n_divs=N_DIVS):
    """Pure-JAX reference mirroring the PyTorch forward semantics."""
    x = jnp.asarray(x, jnp.float32)
    theta = x[:, 2]
    out = jnp.zeros_like(x[:, 3:6])
    for _ in range(n_divs):
        vx = x[:, 3] + out[:, 0]
        vy = x[:, 4] + out[:, 1]
        w = x[:, 5] + out[:, 2]
        alpha_f = theta - jnp.arctan2(w * LF + vy, vx)
        alpha_r = jnp.arctan2(w * LR - vy, vx)
        ffy = FY_W * alpha_f
        fry = RY_W * alpha_r
        vx_dot = -ffy * jnp.sin(theta) + vy * w
        vy_dot = fry + ffy * jnp.cos(theta) - vx * w
        w_dot = MASS * (ffy * LF * jnp.cos(theta) - fry * LR) / IZ
        out = out + jnp.stack([vx_dot, vy_dot, w_dot], axis=1) * (DT / n_divs)
    return out


if __name__ == "__main__":
    key = jax.random.PRNGKey(0)
    n = 2000  # ragged batch (not a multiple of 128) to exercise padding
    # x columns: [pwm, steer (both unused), theta, vx, vy, w]
    k0, k1, k2, k3, k4 = jax.random.split(key, 5)
    pwm = jax.random.uniform(k0, (n, 1), jnp.float32, -1.0, 1.0)
    steer = jax.random.uniform(k1, (n, 1), jnp.float32, -0.3, 0.3)
    theta = jax.random.uniform(k2, (n, 1), jnp.float32, -0.3, 0.3)
    vxy = jax.random.uniform(k3, (n, 2), jnp.float32, 0.2, 2.0)
    w = jax.random.uniform(k4, (n, 1), jnp.float32, -1.0, 1.0)
    x = jnp.concatenate([pwm, steer, theta, vxy, w], axis=1)   # [2000, 6]

    ref = residual_forward_ref(x)

    # Default exact-atan2 path (n=2000 -> 16 rows -> 2 grid steps, pipelined).
    out = jax.block_until_ready(residual_forward(x))
    assert out.shape == (n, 3), out.shape
    assert jnp.allclose(out, ref, atol=1e-4, rtol=1e-4), (
        float(jnp.max(jnp.abs(out - ref))))

    # Opt-in fast path (valid here: vx in [0.2, 2.0] > 0); approximate
    # reciprocal, so a looser tolerance.
    out_fast = jax.block_until_ready(residual_forward(x, fast_atan=True))
    assert out_fast.shape == (n, 3), out_fast.shape
    assert jnp.allclose(out_fast, ref, atol=5e-2, rtol=5e-2), (
        float(jnp.max(jnp.abs(out_fast - ref))))

    print("KERNEL_OK")
</pallas_src>

<mosaic_0001>
module attributes {stable_mosaic.version = 11 : i64} {
  func.func @_residual_kernel(%arg0: i32, %arg1: memref<4x8x128xf32, #tpu.memory_space<vmem>>, %arg2: memref<3x8x128xf32, #tpu.memory_space<vmem>>) attributes {dimension_semantics = [#tpu.dimension_semantics<parallel>], iteration_bounds = array<i64: 2>, scalar_prefetch = 0 : i64, scratch_operands = 0 : i64, tpu.core_type = #tpu.core_type<tc>, window_params = [{transform_indices = @transform_0, window_bounds = array<i64: 4, 8, 128>}, {transform_indices = @transform_1, window_bounds = array<i64: 3, 8, 128>}]} {
    %c0 = arith.constant 0 : index
    %c0_0 = arith.constant 0 : index
    %c0_1 = arith.constant 0 : index
    %0 = vector.load %arg1[%c0, %c0_0, %c0_1] : memref<4x8x128xf32, #tpu.memory_space<vmem>>, vector<1x8x128xf32>
    %1 = vector.shape_cast %0 : vector<1x8x128xf32> to vector<8x128xf32>
    %c1 = arith.constant 1 : index
    %c0_2 = arith.constant 0 : index
    %c0_3 = arith.constant 0 : index
    %2 = vector.load %arg1[%c1, %c0_2, %c0_3] : memref<4x8x128xf32, #tpu.memory_space<vmem>>, vector<1x8x128xf32>
    %3 = vector.shape_cast %2 : vector<1x8x128xf32> to vector<8x128xf32>
    %c2 = arith.constant 2 : index
    %c0_4 = arith.constant 0 : index
    %c0_5 = arith.constant 0 : index
    %4 = vector.load %arg1[%c2, %c0_4, %c0_5] : memref<4x8x128xf32, #tpu.memory_space<vmem>>, vector<1x8x128xf32>
    %5 = vector.shape_cast %4 : vector<1x8x128xf32> to vector<8x128xf32>
    %c3 = arith.constant 3 : index
    %c0_6 = arith.constant 0 : index
    %c0_7 = arith.constant 0 : index
    %6 = vector.load %arg1[%c3, %c0_6, %c0_7] : memref<4x8x128xf32, #tpu.memory_space<vmem>>, vector<1x8x128xf32>
    %7 = vector.shape_cast %6 : vector<1x8x128xf32> to vector<8x128xf32>
    %8 = math.sin %1 : vector<8x128xf32>
    %9 = math.cos %1 : vector<8x128xf32>
    %cst = arith.constant 0.000000e+00 : f32
    %10 = vector.broadcast %cst : f32 to vector<8x128xf32>
    %cst_8 = arith.constant 0.000000e+00 : f32
    %11 = vector.broadcast %cst_8 : f32 to vector<8x128xf32>
    %cst_9 = arith.constant 0.000000e+00 : f32
    %12 = vector.broadcast %cst_9 : f32 to vector<8x128xf32>
    %13 = arith.addf %3, %10 : vector<8x128xf32>
    %14 = arith.addf %5, %11 : vector<8x128xf32>
    %15 = arith.addf %7, %12 : vector<8x128xf32>
    %cst_10 = arith.constant 1.600000e-01 : f32
    %16 = vector.broadcast %cst_10 : f32 to vector<8x128xf32>
    %17 = arith.mulf %15, %16 : vector<8x128xf32>
    %18 = arith.addf %17, %14 : vector<8x128xf32>
    %cst_11 = arith.constant 1.500000e-01 : f32
    %19 = vector.broadcast %cst_11 : f32 to vector<8x128xf32>
    %20 = arith.mulf %15, %19 : vector<8x128xf32>
    %21 = arith.subf %20, %14 : vector<8x128xf32>
    %22 = math.atan2 %18, %13 : vector<8x128xf32>
    %23 = arith.subf %1, %22 : vector<8x128xf32>
    %24 = math.atan2 %21, %13 : vector<8x128xf32>
    %cst_12 = arith.constant 1.000000e+01 : f32
    %25 = vector.broadcast %cst_12 : f32 to vector<8x128xf32>
    %26 = arith.mulf %25, %23 : vector<8x128xf32>
    %cst_13 = arith.constant 1.000000e+01 : f32
    %27 = vector.broadcast %cst_13 : f32 to vector<8x128xf32>
    %28 = arith.mulf %27, %24 : vector<8x128xf32>
    %29 = arith.mulf %26, %9 : vector<8x128xf32>
    %30 = arith.mulf %14, %15 : vector<8x128xf32>
    %31 = arith.mulf %26, %8 : vector<8x128xf32>
    %32 = arith.subf %30, %31 : vector<8x128xf32>
    %33 = arith.addf %28, %29 : vector<8x128xf32>
    %34 = arith.mulf %13, %15 : vector<8x128xf32>
    %35 = arith.subf %33, %34 : vector<8x128xf32>
    %cst_14 = arith.constant 6.070400e+00 : f32
    %36 = vector.broadcast %cst_14 : f32 to vector<8x128xf32>
    %37 = arith.mulf %29, %36 : vector<8x128xf32>
    %cst_15 = arith.constant 5.691000e+00 : f32
    %38 = vector.broadcast %cst_15 : f32 to vector<8x128xf32>
    %39 = arith.mulf %28, %38 : vector<8x128xf32>
    %40 = arith.subf %37, %39 : vector<8x128xf32>
    %cst_16 = arith.constant 2.500000e-02 : f32
    %41 = vector.broadcast %cst_16 : f32 to vector<8x128xf32>
    %42 = arith.mulf %32, %41 : vector<8x128xf32>
    %43 = arith.addf %10, %42 : vector<8x128xf32>
    %cst_17 = arith.constant 2.500000e-02 : f32
    %44 = vector.broadcast %cst_17 : f32 to vector<8x128xf32>
    %45 = arith.mulf %35, %44 : vector<8x128xf32>
    %46 = arith.addf %11, %45 : vector<8x128xf32>
    %cst_18 = arith.constant 2.500000e-02 : f32
    %47 = vector.broadcast %cst_18 : f32 to vector<8x128xf32>
    %48 = arith.mulf %40, %47 : vector<8x128xf32>
    %49 = arith.addf %12, %48 : vector<8x128xf32>
    %50 = arith.addf %3, %43 : vector<8x128xf32>
    %51 = arith.addf %5, %46 : vector<8x128xf32>
    %52 = arith.addf %7, %49 : vector<8x128xf32>
    %cst_19 = arith.constant 1.600000e-01 : f32
    %53 = vector.broadcast %cst_19 : f32 to vector<8x128xf32>
    %54 = arith.mulf %52, %53 : vector<8x128xf32>
    %55 = arith.addf %54, %51 : vector<8x128xf32>
    %cst_20 = arith.constant 1.500000e-01 : f32
    %56 = vector.broadcast %cst_20 : f32 to vector<8x128xf32>
    %57 = arith.mulf %52, %56 : vector<8x128xf32>
    %58 = arith.subf %57, %51 : vector<8x128xf32>
    %59 = math.atan2 %55, %50 : vector<8x128xf32>
    %60 = arith.subf %1, %59 : vector<8x128xf32>
    %61 = math.atan2 %58, %50 : vector<8x128xf32>
    %cst_21 = arith.constant 1.000000e+01 : f32
    %62 = vector.broadcast %cst_21 : f32 to vector<8x128xf32>
    %63 = arith.mulf %62, %60 : vector<8x128xf32>
    %cst_22 = arith.constant 1.000000e+01 : f32
    %64 = vector.broadcast %cst_22 : f32 to vector<8x128xf32>
    %65 = arith.mulf %64, %61 : vector<8x128xf32>
    %66 = arith.mulf %63, %9 : vector<8x128xf32>
    %67 = arith.mulf %51, %52 : vector<8x128xf32>
    %68 = arith.mulf %63, %8 : vector<8x128xf32>
    %69 = arith.subf %67, %68 : vector<8x128xf32>
    %70 = arith.addf %65, %66 : vector<8x128xf32>
    %71 = arith.mulf %50, %52 : vector<8x128xf32>
    %72 = arith.subf %70, %71 : vector<8x128xf32>
    %cst_23 = arith.constant 6.070400e+00 : f32
    %73 = vector.broadcast %cst_23 : f32 to vector<8x128xf32>
    %74 = arith.mulf %66, %73 : vector<8x128xf32>
    %cst_24 = arith.constant 5.691000e+00 : f32
    %75 = vector.broadcast %cst_24 : f32 to vector<8x128xf32>
    %76 = arith.mulf %65, %75 : vector<8x128xf32>
    %77 = arith.subf %74, %76 : vector<8x128xf32>
    %cst_25 = arith.constant 2.500000e-02 : f32
    %78 = vector.broadcast %cst_25 : f32 to vector<8x128xf32>
    %79 = arith.mulf %69, %78 : vector<8x128xf32>
    %80 = arith.addf %43, %79 : vector<8x128xf32>
    %cst_26 = arith.constant 2.500000e-02 : f32
    %81 = vector.broadcast %cst_26 : f32 to vector<8x128xf32>
    %82 = arith.mulf %72, %81 : vector<8x128xf32>
    %83 = arith.addf %46, %82 : vector<8x128xf32>
    %cst_27 = arith.constant 2.500000e-02 : f32
    %84 = vector.broadcast %cst_27 : f32 to vector<8x128xf32>
    %85 = arith.mulf %77, %84 : vector<8x128xf32>
    %86 = arith.addf %49, %85 : vector<8x128xf32>
    %c0_28 = arith.constant 0 : index
    %c0_29 = arith.constant 0 : index
    %c0_30 = arith.constant 0 : index
    %87 = vector.load %arg2[%c0_28, %c0_29, %c0_30] : memref<3x8x128xf32, #tpu.memory_space<vmem>>, vector<1x8x128xf32>
    %88 = vector.shape_cast %87 : vector<1x8x128xf32> to vector<8x128xf32>
    %89 = vector.shape_cast %80 : vector<8x128xf32> to vector<1x8x128xf32>
    tpu.vector_store %arg2[%c0_28, %c0_29, %c0_30], %89 {strides = array<i32>} : memref<3x8x128xf32, #tpu.memory_space<vmem>>, vector<1x8x128xf32>,
    %c1_31 = arith.constant 1 : index
    %c0_32 = arith.constant 0 : index
    %c0_33 = arith.constant 0 : index
    %90 = vector.load %arg2[%c1_31, %c0_32, %c0_33] : memref<3x8x128xf32, #tpu.memory_space<vmem>>, vector<1x8x128xf32>
    %91 = vector.shape_cast %90 : vector<1x8x128xf32> to vector<8x128xf32>
    %92 = vector.shape_cast %83 : vector<8x128xf32> to vector<1x8x128xf32>
    tpu.vector_store %arg2[%c1_31, %c0_32, %c0_33], %92 {strides = array<i32>} : memref<3x8x128xf32, #tpu.memory_space<vmem>>, vector<1x8x128xf32>,
    %c2_34 = arith.constant 2 : index
    %c0_35 = arith.constant 0 : index
    %c0_36 = arith.constant 0 : index
    %93 = vector.load %arg2[%c2_34, %c0_35, %c0_36] : memref<3x8x128xf32, #tpu.memory_space<vmem>>, vector<1x8x128xf32>
    %94 = vector.shape_cast %93 : vector<1x8x128xf32> to vector<8x128xf32>
    %95 = vector.shape_cast %86 : vector<8x128xf32> to vector<1x8x128xf32>
    tpu.vector_store %arg2[%c2_34, %c0_35, %c0_36], %95 {strides = array<i32>} : memref<3x8x128xf32, #tpu.memory_space<vmem>>, vector<1x8x128xf32>,
    return
  }
  func.func @transform_0(%arg0: i32) -> (i32, i32, i32) {
    %c0_i32 = arith.constant 0 : i32
    %c0_i32_0 = arith.constant 0 : i32
    %c0_i32_1 = arith.constant 0 : i32
    return %c0_i32, %arg0, %c0_i32_0 : i32, i32, i32
  }
  func.func @transform_1(%arg0: i32) -> (i32, i32, i32) {
    %c0_i32 = arith.constant 0 : i32
    %c0_i32_0 = arith.constant 0 : i32
    %c0_i32_1 = arith.constant 0 : i32
    return %c0_i32, %arg0, %c0_i32_0 : i32, i32, i32
  }
}

</mosaic_0001>

<llo_original>
// kernel: residual_forward.1
$region0: #{residual_forward.1}
  #allocation0 [shape = 'u32[]', space=smem, size = 0x4, offset = 0x4, fixed_abs, tag = 'smem constant byte address 0x4 - core index']
  #allocation1 [shape = 'u32[144,128]{1,0:T(1,128)}', space=vmem, size = 0x12000, scoped, tag = 'internal scratch']
  %s0 = inlined_call_operand.vmem [shape: f32[4,16,128], index: 0, kind: input, shape index: {}]
  %s1 = inlined_call_operand.vmem [shape: f32[3,16,128], index: 1, kind: output, shape index: {}]
  %s2 = sld [smem:[#allocation0]]
  $region109: #{residual_forward.1} parent=0
    _
  %s4 = ssub.s32 1, %s2
  %s5 = scalar_select 0, %s4, %s2
  $region1: #{residual_forward.1} parent=0
    #allocation2 [shape = 'u8[32768]{0}', space=vmem, size = 0x8000, scoped, tag = 'input window, operand 0']
    #allocation3 [shape = 'u8[24576]{0}', space=vmem, size = 0x6000, scoped, tag = 'output window, operand 0']
    loop: start=0, step=1, limit=4
    $region2: #{residual_forward.1} parent=1 // loop_pre_header
      _
    $region3: #{residual_forward.1} parent=1 // loop_header
      %s7 = sphi 0, %s11
      %p8 = scmp.ge.s32.totalorder %s7, 4
      %s17 = sphi 0, %s19
      %s20 = sphi 0, %s17
      %s21 = sphi 0, %s20
      %s37 = sphi 0, %s21
      %s43 = sphi 0, %s45
      %s46 = sphi 0, %s43
      %s47 = sphi 0, %s46
      %s63 = sphi 0, %s47
    $region4: #{residual_forward.1} parent=1 // loop_header_branch
      %10 = sbr.rel (%p8) target = $region8
    $region5: #{residual_forward.1} parent=1 // loop_body
      %s12 = ssub.s32 %s7, 1
      %s13 = ssub.s32 %s7, 2
      %s14 = sadd.s32 %s7, 1
      %s15 = ssub.s32 %s7, %s14
      %p16 = scmp.eq.s32.totalorder %s15, 0
      %s18 = sadd.s32 %s17, 1
      %s19 = scalar_select %p16, %s17, %s18
      %p22 = pneg %p16
      %p23 = scmp.eq.s32.totalorder %s7, 1
      %p24 = por %p22, %p23
      %p25 = scmp.ne.s32.totalorder %s17, %s20
      %p26 = scmp.eq.s32.totalorder %s7, 0
      %p27 = por %p25, %p26
      %p28 = scmp.ne.s32.totalorder %s17, %s20
      %p29 = scmp.eq.s32.totalorder %s12, 1
      %p30 = por %p28, %p29
      %p31 = scmp.ne.s32.totalorder %s20, %s21
      %p32 = scmp.eq.s32.totalorder %s12, 0
      %p33 = por %p31, %p32
      %p34 = scmp.ne.s32.totalorder %s20, %s21
      %p35 = scmp.eq.s32.totalorder %s13, 1
      %p36 = por %p34, %p35
      %p38 = scmp.ne.s32.totalorder %s21, %s37
      %p39 = scmp.eq.s32.totalorder %s13, 0
      %p40 = por %p38, %p39
      %s41 = ssub.s32 %s7, %s14
      %p42 = scmp.eq.s32.totalorder %s41, 0
      %s44 = sadd.s32 %s43, 1
      %s45 = scalar_select %p42, %s43, %s44
      %p48 = pneg %p42
      %p49 = scmp.eq.s32.totalorder %s7, 1
      %p50 = por %p48, %p49
      %p51 = scmp.ne.s32.totalorder %s43, %s46
      %p52 = scmp.eq.s32.totalorder %s7, 0
      %p53 = por %p51, %p52
      %p54 = scmp.ne.s32.totalorder %s43, %s46
      %p55 = scmp.eq.s32.totalorder %s12, 1
      %p56 = por %p54, %p55
      %p57 = scmp.ne.s32.totalorder %s46, %s47
      %p58 = scmp.eq.s32.totalorder %s12, 0
      %p59 = por %p57, %p58
      %p60 = scmp.ne.s32.totalorder %s46, %s47
      %p61 = scmp.eq.s32.totalorder %s13, 1
      %p62 = por %p60, %p61
      %p64 = scmp.ne.s32.totalorder %s47, %s63
      %p65 = scmp.eq.s32.totalorder %s13, 0
      %p66 = por %p64, %p65
      %p67 = scmp.le.s32.totalorder 1, %s7
      %p68 = scmp.lt.s32.totalorder %s7, 3
      %p69 = pnand %p67, %p68
      %p70 = pneg %p69
      // Predicated region
      $region9: #{residual_forward.1} parent=5 // pred_check
        _
      $region10: #{residual_forward.1} parent=5 // pred_check_branch
        %72 = sbr.rel (%p69) target = $region12
      $region11: #{residual_forward.1} parent=5 // pred_region
        %s73 = ssub.s32 %s7, 1
      $region12: #{residual_forward.1} parent=5 // pred_fallthru
        _
      %p74 = scmp.lt.s32.totalorder %s7, 2
      // Predicated region
      $region13: #{residual_forward.1} parent=5 // pred_check
        %p75 = pneg %p74
      $region14: #{residual_forward.1} parent=5 // pred_check_branch
        %77 = sbr.rel (%p75) target = $region16
      $region15: #{residual_forward.1} parent=5 // pred_region
        // Predicated region
        $region17: #{residual_forward.1} parent=15 // pred_check
          %p78 = pneg %p27
        $region18: #{residual_forward.1} parent=15 // pred_check_branch
          %80 = sbr.rel (%p78) target = $region20
        $region19: #{residual_forward.1} parent=15 // pred_region
          %s81 = sand.u32 %s17, 1
          %s82 = sand.u32 %s17, 1
          %s83 = smul.addr %s82, 32
          %s84 = scalar_lea.vmem [#allocation2], %s83
          %s85 = smul.addr %s7, 8
          %s86 = scalar_lea.vmem %s0, %s85
          // Predicated region
          $region21: #{residual_forward.1} parent=19 // pred_check
            _
          $region22: #{residual_forward.1} parent=19 // pred_check_branch
            %88 = sbr.rel (0) target = $region24
          $region23: #{residual_forward.1} parent=19 // pred_region
            // Predicated region
            $region25: #{residual_forward.1} parent=23 // pred_check
              _
            $region26: #{residual_forward.1} parent=23 // pred_check_branch
              %90 = sbr.rel (0) target = $region28
            $region27: #{residual_forward.1} parent=23 // pred_region
              // Predicated region
              $region40: #{residual_forward.1} parent=27 // pred_check
                _
              $region41: #{residual_forward.1} parent=27 // pred_check_branch
                %111 = sbr.rel (0) target = $region43
              $region42: #{residual_forward.1} parent=27 // pred_region
                loop: start=0, step=1, limit=1
                $region44: #{residual_forward.1} parent=42 // loop_pre_header
                  _
                $region45: #{residual_forward.1} parent=42 // loop_header
                  %s113 = sphi 0, %s117
                  %p114 = scmp.ge.s32.totalorder %s113, 1
                  %s118 = sphi %s86, %s86
                  %s119 = sphi %s84, %s84
                $region46: #{residual_forward.1} parent=42 // loop_header_branch
                  %116 = sbr.rel (%p114) target = $region50
                $region47: #{residual_forward.1} parent=42 // loop_body
                  %v120 = vld [vmem:[%s118] sm:$0xff]
                  %121 = vst [vmem:[%s119] sm:$0xff] %v120
                  %v122 = vld [vmem:[%s118 + $0x10] sm:$0xff]
                  %123 = vst [vmem:[%s119 + $0x8] sm:$0xff] %v122
                  %v124 = vld [vmem:[%s118 + $0x20] sm:$0xff]
                  %125 = vst [vmem:[%s119 + $0x10] sm:$0xff] %v124
                  %v126 = vld [vmem:[%s118 + $0x30] sm:$0xff]
                  %127 = vst [vmem:[%s119 + $0x18] sm:$0xff] %v126
                $region48: #{residual_forward.1} parent=42 // loop_footer
                  %s117 = sadd.s32 1, %s113
                $region49: #{residual_forward.1} parent=42 // loop_footer_branch
                  %112 = sbr.rel target = $region45
                $region50: #{residual_forward.1} parent=42 // loop_exit
                  _
              $region43: #{residual_forward.1} parent=27 // pred_fallthru
                _
              // Predicated region
              $region51: #{residual_forward.1} parent=27 // pred_check
                _
              $region52: #{residual_forward.1} parent=27 // pred_check_branch
                %129 = sbr.rel target = $region54
              $region53: #{residual_forward.1} parent=27 // pred_region
                _
              $region54: #{residual_forward.1} parent=27 // pred_fallthru
                _
            $region28: #{residual_forward.1} parent=23 // pred_fallthru
              _
            // Predicated region
            $region29: #{residual_forward.1} parent=23 // pred_check
              _
            $region30: #{residual_forward.1} parent=23 // pred_check_branch
              %92 = sbr.rel target = $region32
            $region31: #{residual_forward.1} parent=23 // pred_region
              loop: start=0, step=1, limit=1
              $region33: #{residual_forward.1} parent=31 // loop_pre_header
                _
              $region34: #{residual_forward.1} parent=31 // loop_header
                %s95 = sphi 0, %s99
                %p96 = scmp.ge.s32.totalorder %s95, 1
                %s100 = sphi %s86, %s86
                %s101 = sphi %s84, %s84
              $region35: #{residual_forward.1} parent=31 // loop_header_branch
                %98 = sbr.rel (%p96) target = $region39
              $region36: #{residual_forward.1} parent=31 // loop_body
                %v102 = vld [vmem:[%s100] sm:$0xff]
                %103 = vst [vmem:[%s101] sm:$0xff] %v102
                %v104 = vld [vmem:[%s100 + $0x10] sm:$0xff]
                %105 = vst [vmem:[%s101 + $0x8] sm:$0xff] %v104
                %v106 = vld [vmem:[%s100 + $0x20] sm:$0xff]
                %107 = vst [vmem:[%s101 + $0x10] sm:$0xff] %v106
                %v108 = vld [vmem:[%s100 + $0x30] sm:$0xff]
                %109 = vst [vmem:[%s101 + $0x18] sm:$0xff] %v108
              $region37: #{residual_forward.1} parent=31 // loop_footer
                %s99 = sadd.s32 1, %s95
              $region38: #{residual_forward.1} parent=31 // loop_footer_branch
                %94 = sbr.rel target = $region34
              $region39: #{residual_forward.1} parent=31 // loop_exit
                _
            $region32: #{residual_forward.1} parent=23 // pred_fallthru
              _
          $region24: #{residual_forward.1} parent=19 // pred_fallthru
            _
          %130 = vnop
        $region20: #{residual_forward.1} parent=15 // pred_fallthru
          _
      $region16: #{residual_forward.1} parent=5 // pred_fallthru
        _
      %p131 = scmp.le.s32.totalorder 1, %s7
      %p132 = scmp.lt.s32.totalorder %s7, 3
      %p133 = pnand %p131, %p132
      %p134 = pneg %p133
      // Predicated region
      $region55: #{residual_forward.1} parent=5 // pred_check
        _
      $region56: #{residual_forward.1} parent=5 // pred_check_branch
        %136 = sbr.rel (%p133) target = $region58
      $region57: #{residual_forward.1} parent=5 // pred_region
        %s137 = ssub.s32 %s7, 1
        %s138 = sand.u32 %s20, 1
        %s139 = sand.u32 %s20, 1
        %s140 = smul.addr %s139, 32
        %s141 = scalar_lea.vmem [#allocation2], %s140
        // Predicated region
        $region59: #{residual_forward.1} parent=57 // pred_check
          %p142 = pneg %p33
        $region60: #{residual_forward.1} parent=57 // pred_check_branch
          %144 = sbr.rel (%p142) target = $region62
        $region61: #{residual_forward.1} parent=57 // pred_region
          _
        $region62: #{residual_forward.1} parent=57 // pred_fallthru
          _
        %s145 = sand.u32 %s20, 1
        %s146 = sand.u32 %s20, 1
        %s147 = smul.addr %s146, 32
        %s148 = scalar_lea.vmem [#allocation2], %s147
        %p149 = pneg %p33
        %p150 = pneg %p30
        %p151 = pneg %p59
        %p152 = pneg %p56
        %s153 = sand.u32 %s46, 1
        %s154 = sand.u32 %s46, 1
        %s155 = smul.addr %s154, 24
        %s156 = scalar_lea.vmem [#allocation3], %s155
        %v157 = vld [vmem:[%s141] sm:$0xff]
        %s158 = scalar_lea.vmem %s141, 8 [#allocation2]
        %v159 = vld [vmem:[%s158] sm:$0xff]
        %s160 = scalar_lea.vmem %s141, 16 [#allocation2]
        %v161 = vld [vmem:[%s160] sm:$0xff]
        %s162 = scalar_lea.vmem %s141, 24 [#allocation2]
        %v163 = vld [vmem:[%s162] sm:$0xff]
        %v164 = vand.u32 2147483647, %v157
        %vm165 = vcmp.le.f32.partialorder %v164, 0.7853982
        %vm166 = vcmp.lt.s32.totalorder %v157, 0
        %v167 = vand.u32 %v157, 2139095040
        %v168 = vshrl.u32 %v167, 23
        %v169 = vsub.s32 %v168, 127
        %v170 = vand.u32 2147483647, %v157
        %v171 = vand.u32 %v170, 8388607
        %v172 = vor.u32 %v171, 8388608
        %v173 = vsub.s32 0, %v172
        %v174 = vadd.s32 %v169, 1
        %vm175 = vcmp.gt.s32.totalorder %v174, 0
        %v176 = vsel %vm175, %v174, 0
        %v177 = vshrl.u32 %v176, 5
        %v178 = vand.u32 %v176, 31
        %v179 = vsub.s32 32, %v178
        %v180 = vshrl.u32 683565275, %v179
        %v181 = vshll.u32 683565275, %v178
        %v182 = vshrl.u32 2475754826, %v179
        %v183 = vor.u32 %v181, %v182
        %v184 = vshll.u32 2475754826, %v178
        %v185 = vshrl.u32 2131351028, %v179
        %v186 = vor.u32 %v184, %v185
        %v187 = vshll.u32 2131351028, %v178
        %v188 = vshrl.u32 2102212464, %v179
        %v189 = vor.u32 %v187, %v188
        %v190 = vshll.u32 2102212464, %v178
        %v191 = vshrl.u32 920167782, %v179
        %v192 = vor.u32 %v190, %v191
        %v193 = vshll.u32 920167782, %v178
        %v194 = vshrl.u32 1326507024, %v179
        %v195 = vor.u32 %v193, %v194
        %vm196 = vcmp.lt.s32.totalorder %v177, 1
        %vm197 = vcmp.lt.s32.totalorder %v177, 2
        %vm198 = vcmp.lt.s32.totalorder %v177, 3
        %vm199 = vcmp.lt.s32.totalorder %v177, 4
        %v200 = vsel %vm196, %v180, %v183
        %v201 = vsel %vm199, %v189, 2102212464
        %v202 = vsel %vm198, %v186, %v201
        %v203 = vsel %vm197, %v200, %v202
        %v204 = vsel %vm196, %v183, %v186
        %v205 = vsel %vm199, %v192, 920167782
        %v206 = vsel %vm198, %v189, %v205
        %v207 = vsel %vm197, %v204, %v206
        %v208 = vsel %vm196, %v186, %v189
        %v209 = vsel %vm199, %v195, 1326507024
        %v210 = vsel %vm198, %v192, %v209
        %v211 = vsel %vm197, %v208, %v210
        %v212 = vshll.u32 %v172, 8
        %v213 = vmul.u32.u64.compose %v212, %v211
        %v214 = vextract.low.u32 %v213
        %v215 = vextract.high.u32 %v213
        %v216 = vmul.u32.u64.compose %v212, %v207
        %v217 = vextract.low.u32 %v216
        %v218 = vextract.high.u32 %v216
        %v219 = vmul.u32 %v212, %v203
        %v220 = vadd.s32 %v215, %v217
        %vm221 = vc.u32 %v215, %v217
        %v222 = vadd.s32 %v218, 1
        %v223 = vsel %vm221, %v222, %v218
        %v224 = vadd.s32 %v219, %v223
        %v225 = vadd.s32 %v224, 536870912
        %v226 = vshrl.u32 %v225, 30
        %v227 = vshll.u32 %v226, 30
        %v228 = vsub.s32 %v224, %v227
        %vm229 = vcmp.lt.s32.totalorder %v228, 0
        %v230 = vsub.s32 0, %v228
        %v231 = vsel %vm229, %v230, %v228
        %v232 = vclz %v231
        %v233 = vsub.s32 %v232, 2
        %vm234 = vcmp.gt.s32.totalorder 0, %v233
        %v235 = vsel %vm234, 0, %v233
        %v236 = vsub.s32 32, %v235
        %v237 = vshll.u32 %v228, %v235
        %v238 = vshrl.u32 %v220, %v236
        %v239 = vor.u32 %v237, %v238
        %v240 = vsub.s32 4294967266, %v235
        %v241 = vadd.s32 %v240, 127
        %v242 = vshll.u32 %v241, 23
        %v243 = vor.u32 4788187, %v242
        %v244 = vand.u32 2147483647, %v243
        %v246 = vcvt.s32.f32 %v239
        %v247 = vmul.f32 %v246, %v244
        %v248 = vxor.u32 %v247, 2147483648
        %v249 = vsel %vm166, %v248, %v247
        %v250 = vsub.s32 4, %v226
        %v251 = vsel %vm166, %v250, %v226
        %v252 = vsel %vm165, %v157, %v249
        %v253 = vsel %vm165, 0, %v251
        %v254 = vcosq.f32.pop %v252
        %v255 = vsinq.f32.pop %v252
        %vm256 = vweird.f32 %v157
        %v257 = vadd.s32 %v253, 3
        %v258 = vand.u32 %v257, 3
        %vm259 = vcmp.lt.s32.totalorder %v258, 2
        %vm260 = vcmp.eq.s32.totalorder %v258, 0
        %v261 = vxor.u32 %v255, 2147483648
        %v262 = vsel %vm260, %v254, %v261
        %vm263 = vcmp.eq.s32.totalorder %v258, 2
        %v264 = vxor.u32 %v254, 2147483648
        %v265 = vsel %vm263, %v264, %v255
        %v266 = vsel %vm259, %v262, %v265
        %v267 = vsel %vm256, nan, %v266
        %v268 = vand.u32 2147483647, %v157
        %vm269 = vcmp.le.f32.partialorder %v268, 0.7853982
        %vm270 = vcmp.lt.s32.totalorder %v157, 0
        %v271 = vand.u32 %v157, 2139095040
        %v272 = vshrl.u32 %v271, 23
        %v273 = vsub.s32 %v272, 127
        %v274 = vand.u32 2147483647, %v157
        %v275 = vand.u32 %v274, 8388607
        %v276 = vor.u32 %v275, 8388608
        %v277 = vsub.s32 0, %v276
        %v278 = vadd.s32 %v273, 1
        %vm279 = vcmp.gt.s32.totalorder %v278, 0
        %v280 = vsel %vm279, %v278, 0
        %v281 = vshrl.u32 %v280, 5
        %v282 = vand.u32 %v280, 31
        %v283 = vsub.s32 32, %v282
        %v284 = vshrl.u32 683565275, %v283
        %v285 = vshll.u32 683565275, %v282
        %v286 = vshrl.u32 2475754826, %v283
        %v287 = vor.u32 %v285, %v286
        %v288 = vshll.u32 2475754826, %v282
        %v289 = vshrl.u32 2131351028, %v283
        %v290 = vor.u32 %v288, %v289
        %v291 = vshll.u32 2131351028, %v282
        %v292 = vshrl.u32 2102212464, %v283
        %v293 = vor.u32 %v291, %v292
        %v294 = vshll.u32 2102212464, %v282
        %v295 = vshrl.u32 920167782, %v283
        %v296 = vor.u32 %v294, %v295
        %v297 = vshll.u32 920167782, %v282
        %v298 = vshrl.u32 1326507024, %v283
        %v299 = vor.u32 %v297, %v298
        %vm300 = vcmp.lt.s32.totalorder %v281, 1
        %vm301 = vcmp.lt.s32.totalorder %v281, 2
        %vm302 = vcmp.lt.s32.totalorder %v281, 3
        %vm303 = vcmp.lt.s32.totalorder %v281, 4
        %v304 = vsel %vm300, %v284, %v287
        %v305 = vsel %vm303, %v293, 2102212464
        %v306 = vsel %vm302, %v290, %v305
        %v307 = vsel %vm301, %v304, %v306
        %v308 = vsel %vm300, %v287, %v290
        %v309 = vsel %vm303, %v296, 920167782
        %v310 = vsel %vm302, %v293, %v309
        %v311 = vsel %vm301, %v308, %v310
        %v312 = vsel %vm300, %v290, %v293
        %v313 = vsel %vm303, %v299, 1326507024
        %v314 = vsel %vm302, %v296, %v313
        %v315 = vsel %vm301, %v312, %v314
        %v316 = vshll.u32 %v276, 8
        %v317 = vmul.u32.u64.compose %v316, %v315
        %v318 = vextract.low.u32 %v317
        %v319 = vextract.high.u32 %v317
        %v320 = vmul.u32.u64.compose %v316, %v311
        %v321 = vextract.low.u32 %v320
        %v322 = vextract.high.u32 %v320
        %v323 = vmul.u32 %v316, %v307
        %v324 = vadd.s32 %v319, %v321
        %vm325 = vc.u32 %v319, %v321
        %v326 = vadd.s32 %v322, 1
        %v327 = vsel %vm325, %v326, %v322
        %v328 = vadd.s32 %v323, %v327
        %v329 = vadd.s32 %v328, 536870912
        %v330 = vshrl.u32 %v329, 30
        %v331 = vshll.u32 %v330, 30
        %v332 = vsub.s32 %v328, %v331
        %vm333 = vcmp.lt.s32.totalorder %v332, 0
        %v334 = vsub.s32 0, %v332
        %v335 = vsel %vm333, %v334, %v332
        %v336 = vclz %v335
        %v337 = vsub.s32 %v336, 2
        %vm338 = vcmp.gt.s32.totalorder 0, %v337
        %v339 = vsel %vm338, 0, %v337
        %v340 = vsub.s32 32, %v339
        %v341 = vshll.u32 %v332, %v339
        %v342 = vshrl.u32 %v324, %v340
        %v343 = vor.u32 %v341, %v342
        %v344 = vsub.s32 4294967266, %v339
        %v345 = vadd.s32 %v344, 127
        %v346 = vshll.u32 %v345, 23
        %v347 = vor.u32 4788187, %v346
        %v348 = vand.u32 2147483647, %v347
        %v350 = vcvt.s32.f32 %v343
        %v351 = vmul.f32 %v350, %v348
        %v352 = vxor.u32 %v351, 2147483648
        %v353 = vsel %vm270, %v352, %v351
        %v354 = vsub.s32 4, %v330
        %v355 = vsel %vm270, %v354, %v330
        %v356 = vsel %vm269, %v157, %v353
        %v357 = vsel %vm269, 0, %v355
        %v358 = vcosq.f32.pop %v356
        %v359 = vsinq.f32.pop %v356
        %vm360 = vweird.f32 %v157
        %v361 = vand.u32 %v357, 3
        %vm362 = vcmp.lt.s32.totalorder %v361, 2
        %vm363 = vcmp.eq.s32.totalorder %v361, 0
        %v364 = vxor.u32 %v359, 2147483648
        %v365 = vsel %vm363, %v358, %v364
        %vm366 = vcmp.eq.s32.totalorder %v361, 2
        %v367 = vxor.u32 %v358, 2147483648
        %v368 = vsel %vm366, %v367, %v359
        %v369 = vsel %vm362, %v365, %v368
        %v370 = vsel %vm360, nan, %v369
        %v371 = vadd.f32 %v159, 0.0
        %v372 = vadd.f32 %v161, 0.0
        %v373 = vadd.f32 %v163, 0.0
        %v374 = vmul.f32 %v373, 0.16
        %v375 = vadd.f32 %v374, %v372
        %v376 = vmul.f32 %v373, 0.15
        %v377 = vsub.f32 %v376, %v372
        %v378 = vand.u32 2147483647, %v371
        %v379 = vand.u32 2147483647, %v375
        %v380 = vmin.f32 %v378, %v379
        %v381 = vmax.f32 %v378, %v379
        %v382 = vrcp.pop %v381
        %v383 = vmul.f32 %v380, %v382
        %v384 = vmul.f32 %v383, %v383
        %v385 = vmul.f32 0.002785687, %v384
        %v386 = vadd.f32 %v385, -0.015866
        %v387 = vmul.f32 %v386, %v384
        %v388 = vadd.f32 %v387, 0.04247222
        %v389 = vmul.f32 %v388, %v384
        %v390 = vadd.f32 %v389, -0.074975304
        %v391 = vmul.f32 %v390, %v384
        %v392 = vadd.f32 %v391, 0.1064488
        %v393 = vmul.f32 %v392, %v384
        %v394 = vadd.f32 %v393, -0.14207031
        %v395 = vmul.f32 %v394, %v384
        %v396 = vadd.f32 %v395, 0.19993454
        %v397 = vmul.f32 %v396, %v384
        %v398 = vadd.f32 %v397, -0.33333147
        %v399 = vmul.f32 %v398, %v384
        %v400 = vmul.f32 %v399, %v383
        %v401 = vadd.f32 %v400, %v383
        %vm402 = vcmp.gt.f32.partialorder %v379, %v378
        %v403 = vsub.f32 1.5707964, %v401
        %v404 = vsel %vm402, %v403, %v401
        %vm405 = vcmp.lt.f32.partialorder %v371, 0.0
        %v406 = vsub.f32 3.1415927, %v404
        %v407 = vsel %vm405, %v406, %v404
        %vm408 = vcmp.lt.s32.totalorder %v371, 0
        %v409 = vsel %vm408, 3.1415927, 0.0
        %vm410 = vcmp.eq.f32.partialorder %v375, 0.0
        %v411 = vsel %vm410, %v409, %v407
        %vm412 = vcmp.ne.f32.partialorder %v371, %v371
        %vm413 = vcmp.ne.f32.partialorder %v375, %v375
        %vm414 = vmor %vm412, %vm413
        %v415 = vsel %vm414, nan, %v411
        %vm416 = vcmp.lt.f32.partialorder %v371, 0.0
        %v417 = vsel %vm416, 2.3561945, 0.7853982
        %vm418 = vcmp.eq.s32.totalorder %v378, inf
        %vm419 = vcmp.eq.s32.totalorder %v379, inf
        %vm420 = vmand %vm418, %vm419
        %v421 = vsel %vm420, %v417, %v415
        %v422 = vand.u32 2147483647, %v421
        %v423 = vand.u32 %v375, 2147483648
        %v424 = vor.u32 %v422, %v423
        %v425 = vsub.f32 %v157, %v424
        %v426 = vand.u32 2147483647, %v371
        %v427 = vand.u32 2147483647, %v377
        %v428 = vmin.f32 %v426, %v427
        %v429 = vmax.f32 %v426, %v427
        %v430 = vrcp.pop %v429
        %v431 = vmul.f32 %v428, %v430
        %v432 = vmul.f32 %v431, %v431
        %v433 = vmul.f32 0.002785687, %v432
        %v434 = vadd.f32 %v433, -0.015866
        %v435 = vmul.f32 %v434, %v432
        %v436 = vadd.f32 %v435, 0.04247222
        %v437 = vmul.f32 %v436, %v432
        %v438 = vadd.f32 %v437, -0.074975304
        %v439 = vmul.f32 %v438, %v432
        %v440 = vadd.f32 %v439, 0.1064488
        %v441 = vmul.f32 %v440, %v432
        %v442 = vadd.f32 %v441, -0.14207031
        %v443 = vmul.f32 %v442, %v432
        %v444 = vadd.f32 %v443, 0.19993454
        %v445 = vmul.f32 %v444, %v432
        %v446 = vadd.f32 %v445, -0.33333147
        %v447 = vmul.f32 %v446, %v432
        %v448 = vmul.f32 %v447, %v431
        %v449 = vadd.f32 %v448, %v431
        %vm450 = vcmp.gt.f32.partialorder %v427, %v426
        %v451 = vsub.f32 1.5707964, %v449
        %v452 = vsel %vm450, %v451, %v449
        %vm453 = vcmp.lt.f32.partialorder %v371, 0.0
        %v454 = vsub.f32 3.1415927, %v452
        %v455 = vsel %vm453, %v454, %v452
        %vm456 = vcmp.lt.s32.totalorder %v371, 0
        %v457 = vsel %vm456, 3.1415927, 0.0
        %vm458 = vcmp.eq.f32.partialorder %v377, 0.0
        %v459 = vsel %vm458, %v457, %v455
        %vm460 = vcmp.ne.f32.partialorder %v371, %v371
        %vm461 = vcmp.ne.f32.partialorder %v377, %v377
        %vm462 = vmor %vm460, %vm461
        %v463 = vsel %vm462, nan, %v459
        %vm464 = vcmp.lt.f32.partialorder %v371, 0.0
        %v465 = vsel %vm464, 2.3561945, 0.7853982
        %vm466 = vcmp.eq.s32.totalorder %v426, inf
        %vm467 = vcmp.eq.s32.totalorder %v427, inf
        %vm468 = vmand %vm466, %vm467
        %v469 = vsel %vm468, %v465, %v463
        %v470 = vand.u32 2147483647, %v469
        %v471 = vand.u32 %v377, 2147483648
        %v472 = vor.u32 %v470, %v471
        %v473 = vmul.f32 %v425, 10.0
        %v474 = vmul.f32 %v472, 10.0
        %v475 = vmul.f32 %v473, %v370
        %v476 = vmul.f32 %v372, %v373
        %v477 = vmul.f32 %v473, %v267
        %v478 = vsub.f32 %v476, %v477
        %v479 = vadd.f32 %v474, %v475
        %v480 = vmul.f32 %v371, %v373
        %v481 = vsub.f32 %v479, %v480
        %v482 = vmul.f32 %v475, 6.0704
        %v483 = vmul.f32 %v474, 5.691
        %v484 = vsub.f32 %v482, %v483
        %v485 = vmul.f32 %v478, 0.025
        %v486 = vadd.f32 %v485, 0.0
        %v487 = vmul.f32 %v481, 0.025
        %v488 = vadd.f32 %v487, 0.0
        %v489 = vmul.f32 %v484, 0.025
        %v490 = vadd.f32 %v489, 0.0
        %v491 = vadd.f32 %v159, %v486
        %v492 = vadd.f32 %v161, %v488
        %v493 = vadd.f32 %v163, %v490
        %v494 = vmul.f32 %v493, 0.16
        %v495 = vadd.f32 %v494, %v492
        %v496 = vmul.f32 %v493, 0.15
        %v497 = vsub.f32 %v496, %v492
        %v498 = vand.u32 2147483647, %v491
        %v499 = vand.u32 2147483647, %v495
        %v500 = vmin.f32 %v498, %v499
        %v501 = vmax.f32 %v498, %v499
        %v502 = vrcp.pop %v501
        %v503 = vmul.f32 %v500, %v502
        %v504 = vmul.f32 %v503, %v503
        %v505 = vmul.f32 0.002785687, %v504
        %v506 = vadd.f32 %v505, -0.015866
        %v507 = vmul.f32 %v506, %v504
        %v508 = vadd.f32 %v507, 0.04247222
        %v509 = vmul.f32 %v508, %v504
        %v510 = vadd.f32 %v509, -0.074975304
        %v511 = vmul.f32 %v510, %v504
        %v512 = vadd.f32 %v511, 0.1064488
        %v513 = vmul.f32 %v512, %v504
        %v514 = vadd.f32 %v513, -0.14207031
        %v515 = vmul.f32 %v514, %v504
        %v516 = vadd.f32 %v515, 0.19993454
        %v517 = vmul.f32 %v516, %v504
        %v518 = vadd.f32 %v517, -0.33333147
        %v519 = vmul.f32 %v518, %v504
        %v520 = vmul.f32 %v519, %v503
        %v521 = vadd.f32 %v520, %v503
        %vm522 = vcmp.gt.f32.partialorder %v499, %v498
        %v523 = vsub.f32 1.5707964, %v521
        %v524 = vsel %vm522, %v523, %v521
        %vm525 = vcmp.lt.f32.partialorder %v491, 0.0
        %v526 = vsub.f32 3.1415927, %v524
        %v527 = vsel %vm525, %v526, %v524
        %vm528 = vcmp.lt.s32.totalorder %v491, 0
        %v529 = vsel %vm528, 3.1415927, 0.0
        %vm530 = vcmp.eq.f32.partialorder %v495, 0.0
        %v531 = vsel %vm530, %v529, %v527
        %vm532 = vcmp.ne.f32.partialorder %v491, %v491
        %vm533 = vcmp.ne.f32.partialorder %v495, %v495
        %vm534 = vmor %vm532, %vm533
        %v535 = vsel %vm534, nan, %v531
        %vm536 = vcmp.lt.f32.partialorder %v491, 0.0
        %v537 = vsel %vm536, 2.3561945, 0.7853982
        %vm538 = vcmp.eq.s32.totalorder %v498, inf
        %vm539 = vcmp.eq.s32.totalorder %v499, inf
        %vm540 = vmand %vm538, %vm539
        %v541 = vsel %vm540, %v537, %v535
        %v542 = vand.u32 2147483647, %v541
        %v543 = vand.u32 %v495, 2147483648
        %v544 = vor.u32 %v542, %v543
        %v545 = vsub.f32 %v157, %v544
        %v546 = vand.u32 2147483647, %v491
        %v547 = vand.u32 2147483647, %v497
        %v548 = vmin.f32 %v546, %v547
        %v549 = vmax.f32 %v546, %v547
        %v550 = vrcp.pop %v549
        %v551 = vmul.f32 %v548, %v550
        %v552 = vmul.f32 %v551, %v551
        %v553 = vmul.f32 0.002785687, %v552
        %v554 = vadd.f32 %v553, -0.015866
        %v555 = vmul.f32 %v554, %v552
        %v556 = vadd.f32 %v555, 0.04247222
        %v557 = vmul.f32 %v556, %v552
        %v558 = vadd.f32 %v557, -0.074975304
        %v559 = vmul.f32 %v558, %v552
        %v560 = vadd.f32 %v559, 0.1064488
        %v561 = vmul.f32 %v560, %v552
        %v562 = vadd.f32 %v561, -0.14207031
        %v563 = vmul.f32 %v562, %v552
        %v564 = vadd.f32 %v563, 0.19993454
        %v565 = vmul.f32 %v564, %v552
        %v566 = vadd.f32 %v565, -0.33333147
        %v567 = vmul.f32 %v566, %v552
        %v568 = vmul.f32 %v567, %v551
        %v569 = vadd.f32 %v568, %v551
        %vm570 = vcmp.gt.f32.partialorder %v547, %v546
        %v571 = vsub.f32 1.5707964, %v569
        %v572 = vsel %vm570, %v571, %v569
        %vm573 = vcmp.lt.f32.partialorder %v491, 0.0
        %v574 = vsub.f32 3.1415927, %v572
        %v575 = vsel %vm573, %v574, %v572
        %vm576 = vcmp.lt.s32.totalorder %v491, 0
        %v577 = vsel %vm576, 3.1415927, 0.0
        %vm578 = vcmp.eq.f32.partialorder %v497, 0.0
        %v579 = vsel %vm578, %v577, %v575
        %vm580 = vcmp.ne.f32.partialorder %v491, %v491
        %vm581 = vcmp.ne.f32.partialorder %v497, %v497
        %vm582 = vmor %vm580, %vm581
        %v583 = vsel %vm582, nan, %v579
        %vm584 = vcmp.lt.f32.partialorder %v491, 0.0
        %v585 = vsel %vm584, 2.3561945, 0.7853982
        %vm586 = vcmp.eq.s32.totalorder %v546, inf
        %vm587 = vcmp.eq.s32.totalorder %v547, inf
        %vm588 = vmand %vm586, %vm587
        %v589 = vsel %vm588, %v585, %v583
        %v590 = vand.u32 2147483647, %v589
        %v591 = vand.u32 %v497, 2147483648
        %v592 = vor.u32 %v590, %v591
        %v593 = vmul.f32 %v545, 10.0
        %v594 = vmul.f32 %v592, 10.0
        %v595 = vmul.f32 %v593, %v370
        %v596 = vmul.f32 %v492, %v493
        %v597 = vmul.f32 %v593, %v267
        %v598 = vsub.f32 %v596, %v597
        %v599 = vadd.f32 %v594, %v595
        %v600 = vmul.f32 %v491, %v493
        %v601 = vsub.f32 %v599, %v600
        %v602 = vmul.f32 %v595, 6.0704
        %v603 = vmul.f32 %v594, 5.691
        %v604 = vsub.f32 %v602, %v603
        %v605 = vmul.f32 %v598, 0.025
        %v606 = vadd.f32 %v486, %v605
        %v607 = vmul.f32 %v601, 0.025
        %v608 = vadd.f32 %v488, %v607
        %v609 = vmul.f32 %v604, 0.025
        %v610 = vadd.f32 %v490, %v609
        %611 = vst [vmem:[%s156] sm:$0xff] %v606
        %s612 = scalar_lea.vmem %s156, 8 [#allocation3]
        %613 = vst [vmem:[%s612] sm:$0xff] %v608
        %s614 = scalar_lea.vmem %s156, 16 [#allocation3]
        %615 = vst [vmem:[%s614] sm:$0xff] %v610
        %s616 = sand.u32 %s46, 1
        %s617 = sand.u32 %s46, 1
        %s618 = smul.addr %s617, 24
        %s619 = scalar_lea.vmem [#allocation3], %s618
        // Predicated region
        $region63: #{residual_forward.1} parent=57 // pred_check
          %p620 = pneg %p56
        $region64: #{residual_forward.1} parent=57 // pred_check_branch
          %622 = sbr.rel (%p620) target = $region66
        $region65: #{residual_forward.1} parent=57 // pred_region
          %s623 = smul.addr %s12, 8
          %s624 = scalar_lea.vmem %s1, %s623
          // Predicated region
          $region67: #{residual_forward.1} parent=65 // pred_check
            _
          $region68: #{residual_forward.1} parent=65 // pred_check_branch
            %626 = sbr.rel (0) target = $region70
          $region69: #{residual_forward.1} parent=65 // pred_region
            // Predicated region
            $region71: #{residual_forward.1} parent=69 // pred_check
              _
            $region72: #{residual_forward.1} parent=69 // pred_check_branch
              %628 = sbr.rel (0) target = $region74
            $region73: #{residual_forward.1} parent=69 // pred_region
              // Predicated region
              $region86: #{residual_forward.1} parent=73 // pred_check
                _
              $region87: #{residual_forward.1} parent=73 // pred_check_branch
                %647 = sbr.rel (0) target = $region89
              $region88: #{residual_forward.1} parent=73 // pred_region
                loop: start=0, step=1, limit=1
                $region90: #{residual_forward.1} parent=88 // loop_pre_header
                  _
                $region91: #{residual_forward.1} parent=88 // loop_header
                  %s649 = sphi 0, %s653
                  %p650 = scmp.ge.s32.totalorder %s649, 1
                  %s654 = sphi %s619, %s619
                  %s655 = sphi %s624, %s624
                $region92: #{residual_forward.1} parent=88 // loop_header_branch
                  %652 = sbr.rel (%p650) target = $region96
                $region93: #{residual_forward.1} parent=88 // loop_body
                  %v656 = vld [vmem:[%s654] sm:$0xff]
                  %657 = vst [vmem:[%s655] sm:$0xff] %v656
                  %v658 = vld [vmem:[%s654 + $0x8] sm:$0xff]
                  %659 = vst [vmem:[%s655 + $0x10] sm:$0xff] %v658
                  %v660 = vld [vmem:[%s654 + $0x10] sm:$0xff]
                  %661 = vst [vmem:[%s655 + $0x20] sm:$0xff] %v660
                $region94: #{residual_forward.1} parent=88 // loop_footer
                  %s653 = sadd.s32 1, %s649
                $region95: #{residual_forward.1} parent=88 // loop_footer_branch
                  %648 = sbr.rel target = $region91
                $region96: #{residual_forward.1} parent=88 // loop_exit
                  _
              $region89: #{residual_forward.1} parent=73 // pred_fallthru
                _
              // Predicated region
              $region97: #{residual_forward.1} parent=73 // pred_check
                _
              $region98: #{residual_forward.1} parent=73 // pred_check_branch
                %663 = sbr.rel target = $region100
              $region99: #{residual_forward.1} parent=73 // pred_region
                _
              $region100: #{residual_forward.1} parent=73 // pred_fallthru
                _
            $region74: #{residual_forward.1} parent=69 // pred_fallthru
              _
            // Predicated region
            $region75: #{residual_forward.1} parent=69 // pred_check
              _
            $region76: #{residual_forward.1} parent=69 // pred_check_branch
              %630 = sbr.rel target = $region78
            $region77: #{residual_forward.1} parent=69 // pred_region
              loop: start=0, step=1, limit=1
              $region79: #{residual_forward.1} parent=77 // loop_pre_header
                _
              $region80: #{residual_forward.1} parent=77 // loop_header
                %s633 = sphi 0, %s637
                %p634 = scmp.ge.s32.totalorder %s633, 1
                %s638 = sphi %s619, %s619
                %s639 = sphi %s624, %s624
              $region81: #{residual_forward.1} parent=77 // loop_header_branch
                %636 = sbr.rel (%p634) target = $region85
              $region82: #{residual_forward.1} parent=77 // loop_body
                %v640 = vld [vmem:[%s638] sm:$0xff]
                %641 = vst [vmem:[%s639] sm:$0xff] %v640
                %v642 = vld [vmem:[%s638 + $0x8] sm:$0xff]
                %643 = vst [vmem:[%s639 + $0x10] sm:$0xff] %v642
                %v644 = vld [vmem:[%s638 + $0x10] sm:$0xff]
                %645 = vst [vmem:[%s639 + $0x20] sm:$0xff] %v644
              $region83: #{residual_forward.1} parent=77 // loop_footer
                %s637 = sadd.s32 1, %s633
              $region84: #{residual_forward.1} parent=77 // loop_footer_branch
                %632 = sbr.rel target = $region80
              $region85: #{residual_forward.1} parent=77 // loop_exit
                _
            $region78: #{residual_forward.1} parent=69 // pred_fallthru
              _
          $region70: #{residual_forward.1} parent=65 // pred_fallthru
            _
          %664 = vnop
        $region66: #{residual_forward.1} parent=57 // pred_fallthru
          _
      $region58: #{residual_forward.1} parent=5 // pred_fallthru
        _
      %p665 = scmp.le.s32.totalorder 2, %s7
      // Predicated region
      $region101: #{residual_forward.1} parent=5 // pred_check
        %p666 = pneg %p665
      $region102: #{residual_forward.1} parent=5 // pred_check_branch
        %668 = sbr.rel (%p666) target = $region104
      $region103: #{residual_forward.1} parent=5 // pred_region
        %s669 = ssub.s32 %s7, 2
        // Predicated region
        $region105: #{residual_forward.1} parent=103 // pred_check
          %p670 = pneg %p62
        $region106: #{residual_forward.1} parent=103 // pred_check_branch
          %672 = sbr.rel (%p670) target = $region108
        $region107: #{residual_forward.1} parent=103 // pred_region
          %s673 = sand.u32 %s47, 1
          %s674 = sand.u32 %s47, 1
          %s675 = smul.addr %s674, 24
          %s676 = scalar_lea.vmem [#allocation3], %s675
        $region108: #{residual_forward.1} parent=103 // pred_fallthru
          _
      $region104: #{residual_forward.1} parent=5 // pred_fallthru
        _
    $region6: #{residual_forward.1} parent=1 // loop_footer
      %s11 = sadd.s32 1, %s7
    $region7: #{residual_forward.1} parent=1 // loop_footer_branch
      %6 = sbr.rel target = $region3
    $region8: #{residual_forward.1} parent=1 // loop_exit
      _

</llo_original>
